<compile_context>
chip_gen: v7x
topology: tpu7x:2x2x1
jax: 0.10.0
libtpu: 0.0.40
codegen_flags: <defaults>
</compile_context>

<pallas_src>
import functools

import jax
import jax.numpy as jnp
from jax.experimental import pallas as pl
from jax.experimental.pallas import tpu as pltpu

C_IN = 244
C_OUT = 244
EPS = 1e-5


def _conv_bn_relu_kernel(x_ref, w_ref, shift_ref, o_ref):
    # x_ref:     (Cin, thw)   f32 activation tile (one image, a slab of H*W lanes)
    # w_ref:     (Cout, Cin)  bf16 weight with BN scale folded in
    # shift_ref: (Cout, 1)    f32 folded BN shift (beta - mean * scale)
    # o_ref:     (Cout, thw)  f32 output tile
    x_bf = x_ref[...].astype(jnp.bfloat16)
    acc = jnp.dot(w_ref[...], x_bf, preferred_element_type=jnp.float32)
    y = acc + shift_ref[...]
    o_ref[...] = jnp.maximum(y, 0.0).astype(o_ref.dtype)


@functools.partial(jax.jit, static_argnames=("thw",))
def conv_bn_relu(x_nchw, weight, gamma, beta, running_mean, running_var, *, thw=512):
    """x_nchw: (N, 244, H, W) float32.  Returns (N, 244, H, W) float32."""
    N, C, H, W = x_nchw.shape
    assert C == C_IN
    HW = H * W

    # Free reshape: stays NCHW-contiguous, H*W becomes the lane axis.
    x = x_nchw.reshape(N, C_IN, HW)

    # Fold BatchNorm (eval-mode, running statistics) into the weight + a shift.
    # TODO(synk): PyTorch default training-mode BN uses batch statistics; this
    # kernel implements the standard inference-mode fold.
    scale = gamma / jnp.sqrt(running_var + EPS)            # (Cout,)
    shift = (beta - running_mean * scale).reshape(C_OUT, 1)  # (Cout, 1) f32
    w = weight.reshape(C_OUT, C_IN)                         # 1x1 conv kernel
    w_scaled = (w * scale[:, None]).astype(jnp.bfloat16)    # (Cout, Cin) bf16

    # HW tile: multiple of 128 lanes, or the full HW extent when HW is small
    # (block dim == full array dim is always legal).
    t = min(thw, HW)
    grid = (N, pl.cdiv(HW, t))

    cost = pl.CostEstimate(
        flops=2 * N * HW * C_OUT * C_IN,
        transcendentals=0,
        bytes_accessed=N * C_IN * HW * 4 + N * C_OUT * HW * 4
        + C_OUT * C_IN * 2 + C_OUT * 4,
    )

    out = pl.pallas_call(
        _conv_bn_relu_kernel,
        out_shape=jax.ShapeDtypeStruct((N, C_OUT, HW), jnp.float32),
        grid_spec=pltpu.PrefetchScalarGridSpec(
            num_scalar_prefetch=0,
            grid=grid,
            in_specs=[
                pl.BlockSpec((None, C_IN, t), lambda n, j: (n, 0, j)),   # x
                pl.BlockSpec((C_OUT, C_IN), lambda n, j: (0, 0)),        # weight
                pl.BlockSpec((C_OUT, 1), lambda n, j: (0, 0)),           # shift
            ],
            out_specs=pl.BlockSpec((None, C_OUT, t), lambda n, j: (n, 0, j)),
        ),
        compiler_params=pltpu.CompilerParams(
            dimension_semantics=("parallel", "parallel")),
        cost_estimate=cost,
    )(x, w_scaled, shift)

    # Free reshape back to NCHW.
    return out.reshape(N, C_OUT, H, W)


if __name__ == "__main__":
    key = jax.random.PRNGKey(0)
    k_x, k_w, k_g, k_b, k_m, k_v = jax.random.split(key, 6)

    # Channels fixed at 244 by the module; small batch/spatial for the check.
    N, H, W = 2, 16, 16
    x = jax.random.normal(k_x, (N, C_IN, H, W), jnp.float32)

    weight = jax.random.normal(k_w, (C_OUT, C_IN, 1, 1), jnp.float32) * 0.05
    gamma = 1.0 + 0.1 * jax.random.normal(k_g, (C_OUT,), jnp.float32)
    beta = 0.1 * jax.random.normal(k_b, (C_OUT,), jnp.float32)
    running_mean = 0.1 * jax.random.normal(k_m, (C_OUT,), jnp.float32)
    running_var = jnp.abs(1.0 + 0.1 * jax.random.normal(k_v, (C_OUT,), jnp.float32))

    out = conv_bn_relu(x, weight, gamma, beta, running_mean, running_var)
    out = jax.block_until_ready(out)

    # Reference in plain f32 JAX: 1x1 conv + BN(eval) + ReLU.
    scale = gamma / jnp.sqrt(running_var + EPS)
    shift = beta - running_mean * scale
    ref = jnp.einsum("nchw,oc->nohw", x, weight.reshape(C_OUT, C_IN))
    ref = ref * scale[None, :, None, None] + shift[None, :, None, None]
    ref = jnp.maximum(ref, 0.0)

    err = float(jnp.max(jnp.abs(out - ref)))
    assert jnp.allclose(out, ref, atol=5e-2, rtol=5e-2), f"mismatch vs reference, max abs err={err}"

    print("KERNEL_OK")
</pallas_src>

<mosaic_0001>
module attributes {stable_mosaic.version = 11 : i64} {
  func.func @_conv_bn_relu_kernel(%arg0: i32, %arg1: i32, %arg2: memref<1x244x256xf32, #tpu.memory_space<vmem>>, %arg3: memref<244x244xbf16, #tpu.memory_space<vmem>>, %arg4: memref<244x1xf32, #tpu.memory_space<vmem>>, %arg5: memref<1x244x256xf32, #tpu.memory_space<vmem>>) attributes {dimension_semantics = [#tpu.dimension_semantics<parallel>, #tpu.dimension_semantics<parallel>], iteration_bounds = array<i64: 2, 1>, scalar_prefetch = 0 : i64, scratch_operands = 0 : i64, tpu.core_type = #tpu.core_type<tc>, window_params = [{transform_indices = @transform_0, window_bounds = array<i64: 1, 244, 256>}, {pipeline_mode = #tpu.pipeline_mode<synchronous>, transform_indices = @transform_1, window_bounds = array<i64: 244, 244>}, {pipeline_mode = #tpu.pipeline_mode<synchronous>, transform_indices = @transform_2, window_bounds = array<i64: 244, 1>}, {transform_indices = @transform_3, window_bounds = array<i64: 1, 244, 256>}]} {
    %c0 = arith.constant 0 : index
    %c0_0 = arith.constant 0 : index
    %c0_1 = arith.constant 0 : index
    %0 = vector.load %arg2[%c0, %c0_0, %c0_1] : memref<1x244x256xf32, #tpu.memory_space<vmem>>, vector<1x244x256xf32>
    %1 = vector.shape_cast %0 : vector<1x244x256xf32> to vector<244x256xf32>
    %2 = arith.truncf %1 : vector<244x256xf32> to vector<244x256xbf16>
    %c0_2 = arith.constant 0 : index
    %c0_3 = arith.constant 0 : index
    %3 = vector.load %arg3[%c0_2, %c0_3] : memref<244x244xbf16, #tpu.memory_space<vmem>>, vector<244x244xbf16>
    %cst = arith.constant dense<0.000000e+00> : vector<244x256xf32>
    %4 = tpu.matmul %3, %2, %cst {dimension_numbers = #tpu.dot_dimension_numbers<[1], [0], [0], [1], [0, 0, 1, 1], [], []>} : vector<244x244xbf16>, vector<244x256xbf16>, vector<244x256xf32> -> vector<244x256xf32>
    %c0_4 = arith.constant 0 : index
    %c0_5 = arith.constant 0 : index
    %5 = vector.load %arg4[%c0_4, %c0_5] : memref<244x1xf32, #tpu.memory_space<vmem>>, vector<244x1xf32>
    %6 = vector.broadcast %5 : vector<244x1xf32> to vector<244x256xf32>
    %7 = arith.addf %4, %6 : vector<244x256xf32>
    %cst_6 = arith.constant 0.000000e+00 : f32
    %8 = vector.broadcast %cst_6 : f32 to vector<244x256xf32>
    %9 = arith.maximumf %7, %8 : vector<244x256xf32>
    %c0_7 = arith.constant 0 : index
    %c0_8 = arith.constant 0 : index
    %c0_9 = arith.constant 0 : index
    %10 = vector.load %arg5[%c0_7, %c0_8, %c0_9] : memref<1x244x256xf32, #tpu.memory_space<vmem>>, vector<1x244x256xf32>
    %11 = vector.shape_cast %10 : vector<1x244x256xf32> to vector<244x256xf32>
    %12 = vector.shape_cast %9 : vector<244x256xf32> to vector<1x244x256xf32>
    tpu.vector_store %arg5[%c0_7, %c0_8, %c0_9], %12 {strides = array<i32>} : memref<1x244x256xf32, #tpu.memory_space<vmem>>, vector<1x244x256xf32>,
    return
  }
  func.func @transform_0(%arg0: i32, %arg1: i32) -> (i32, i32, i32) {
    %c0_i32 = arith.constant 0 : i32
    %c0_i32_0 = arith.constant 0 : i32
    return %arg0, %c0_i32, %arg1 : i32, i32, i32
  }
  func.func @transform_1(%arg0: i32, %arg1: i32) -> (i32, i32) {
    %c0_i32 = arith.constant 0 : i32
    %c0_i32_0 = arith.constant 0 : i32
    %c0_i32_1 = arith.constant 0 : i32
    return %c0_i32, %c0_i32_0 : i32, i32
  }
  func.func @transform_2(%arg0: i32, %arg1: i32) -> (i32, i32) {
    %c0_i32 = arith.constant 0 : i32
    %c0_i32_0 = arith.constant 0 : i32
    %c0_i32_1 = arith.constant 0 : i32
    return %c0_i32, %c0_i32_0 : i32, i32
  }
  func.func @transform_3(%arg0: i32, %arg1: i32) -> (i32, i32, i32) {
    %c0_i32 = arith.constant 0 : i32
    %c0_i32_0 = arith.constant 0 : i32
    return %arg0, %c0_i32, %arg1 : i32, i32, i32
  }
}

</mosaic_0001>

<llo_original>
// kernel: conv_bn_relu.1
$region0: #{conv_bn_relu.1}
  #allocation0 [shape = 'u32[]', space=smem, size = 0x4, offset = 0x4, fixed_abs, tag = 'smem constant byte address 0x4 - core index']
  #allocation1 [shape = 'u32[144,128]{1,0:T(1,128)}', space=vmem, size = 0x12000, scoped, tag = 'internal scratch']
  %s0 = inlined_call_operand.vmem [shape: f32[2,244,256], index: 0, kind: input, shape index: {}]
  %s1 = inlined_call_operand.vmem [shape: bf16[244,244], index: 1, kind: input, shape index: {}]
  %s2 = inlined_call_operand.vmem [shape: f32[244,1], index: 2, kind: input, shape index: {}]
  %s3 = inlined_call_operand.vmem [shape: f32[2,244,256], index: 3, kind: output, shape index: {}]
  %s4 = sld [smem:[#allocation0]]
  $region45: #{conv_bn_relu.1} parent=0
    _
  %s6 = ssub.s32 1, %s4
  %s7 = scalar_select 0, %s6, %s4
  loop: start=0, step=1, limit=4
  $region2: #{conv_bn_relu.1} parent=0 // loop_pre_header
    _
  $region3: #{conv_bn_relu.1} parent=0 // loop_header
    %s9 = sphi 0, %s13
    %p10 = scmp.ge.s32.totalorder %s9, 4
    %s16 = sphi 0, %s28
    %s17 = sphi 0, %s24
    %s18 = sphi 0, %s16
    %s19 = sphi 0, %s17
    %s20 = sphi 0, %s18
    %s21 = sphi 0, %s19
    %s33 = sphi 0, %s35
    %s36 = sphi 0, %s33
    %s37 = sphi 0, %s36
    %s53 = sphi 0, %s37
    %s57 = sphi 0, %s57
    %s59 = sphi 0, %s57
    %s60 = sphi 0, %s59
    %s74 = sphi 0, %s60
    %s78 = sphi 0, %s78
    %s80 = sphi 0, %s78
    %s81 = sphi 0, %s80
    %s95 = sphi 0, %s81
    %s103 = sphi 0, %s105
    %s106 = sphi 0, %s103
    %s107 = sphi 0, %s106
    %s123 = sphi 0, %s107
  $region4: #{conv_bn_relu.1} parent=0 // loop_header_branch
    %12 = sbr.rel (%p10) target = $region8
  $region5: #{conv_bn_relu.1} parent=0 // loop_body
    %s14 = ssub.s32 %s9, 1
    %s15 = ssub.s32 %s9, 2
    %s22 = sadd.s32 1, %s17
    %p23 = scmp.ge.s32.totalorder %s22, 1
    %s24 = scalar_select %p23, 0, %s22
    %s25 = sadd.s32 1, %s16
    %s26 = scalar_select %p23, %s25, %s16
    %p27 = scmp.ge.s32.totalorder %s26, 2
    %s28 = scalar_select %p27, 0, %s26
    %s29 = ssub.s32 %s16, %s28
    %s30 = ssub.s32 %s17, %s24
    %s31 = sor.u32 %s29, %s30
    %p32 = scmp.eq.s32.totalorder %s31, 0
    %s34 = sadd.s32 %s33, 1
    %s35 = scalar_select %p32, %s33, %s34
    %p38 = pneg %p32
    %p39 = scmp.eq.s32.totalorder %s9, 1
    %p40 = por %p38, %p39
    %p41 = scmp.ne.s32.totalorder %s33, %s36
    %p42 = scmp.eq.s32.totalorder %s9, 0
    %p43 = por %p41, %p42
    %p44 = scmp.ne.s32.totalorder %s33, %s36
    %p45 = scmp.eq.s32.totalorder %s14, 1
    %p46 = por %p44, %p45
    %p47 = scmp.ne.s32.totalorder %s36, %s37
    %p48 = scmp.eq.s32.totalorder %s14, 0
    %p49 = por %p47, %p48
    %p50 = scmp.ne.s32.totalorder %s36, %s37
    %p51 = scmp.eq.s32.totalorder %s15, 1
    %p52 = por %p50, %p51
    %p54 = scmp.ne.s32.totalorder %s37, %s53
    %p55 = scmp.eq.s32.totalorder %s15, 0
    %p56 = por %p54, %p55
    %s58 = sadd.s32 %s57, 1
    %p61 = scmp.eq.s32.totalorder %s9, 1
    %p62 = scmp.ne.s32.totalorder %s57, %s59
    %p63 = scmp.eq.s32.totalorder %s9, 0
    %p64 = por %p62, %p63
    %p65 = scmp.ne.s32.totalorder %s57, %s59
    %p66 = scmp.eq.s32.totalorder %s14, 1
    %p67 = por %p65, %p66
    %p68 = scmp.ne.s32.totalorder %s59, %s60
    %p69 = scmp.eq.s32.totalorder %s14, 0
    %p70 = por %p68, %p69
    %p71 = scmp.ne.s32.totalorder %s59, %s60
    %p72 = scmp.eq.s32.totalorder %s15, 1
    %p73 = por %p71, %p72
    %p75 = scmp.ne.s32.totalorder %s60, %s74
    %p76 = scmp.eq.s32.totalorder %s15, 0
    %p77 = por %p75, %p76
    %s79 = sadd.s32 %s78, 1
    %p82 = scmp.eq.s32.totalorder %s9, 1
    %p83 = scmp.ne.s32.totalorder %s78, %s80
    %p84 = scmp.eq.s32.totalorder %s9, 0
    %p85 = por %p83, %p84
    %p86 = scmp.ne.s32.totalorder %s78, %s80
    %p87 = scmp.eq.s32.totalorder %s14, 1
    %p88 = por %p86, %p87
    %p89 = scmp.ne.s32.totalorder %s80, %s81
    %p90 = scmp.eq.s32.totalorder %s14, 0
    %p91 = por %p89, %p90
    %p92 = scmp.ne.s32.totalorder %s80, %s81
    %p93 = scmp.eq.s32.totalorder %s15, 1
    %p94 = por %p92, %p93
    %p96 = scmp.ne.s32.totalorder %s81, %s95
    %p97 = scmp.eq.s32.totalorder %s15, 0
    %p98 = por %p96, %p97
    %s99 = ssub.s32 %s16, %s28
    %s100 = ssub.s32 %s17, %s24
    %s101 = sor.u32 %s99, %s100
    %p102 = scmp.eq.s32.totalorder %s101, 0
    %s104 = sadd.s32 %s103, 1
    %s105 = scalar_select %p102, %s103, %s104
    %p108 = pneg %p102
    %p109 = scmp.eq.s32.totalorder %s9, 1
    %p110 = por %p108, %p109
    %p111 = scmp.ne.s32.totalorder %s103, %s106
    %p112 = scmp.eq.s32.totalorder %s9, 0
    %p113 = por %p111, %p112
    %p114 = scmp.ne.s32.totalorder %s103, %s106
    %p115 = scmp.eq.s32.totalorder %s14, 1
    %p116 = por %p114, %p115
    %p117 = scmp.ne.s32.totalorder %s106, %s107
    %p118 = scmp.eq.s32.totalorder %s14, 0
    %p119 = por %p117, %p118
    %p120 = scmp.ne.s32.totalorder %s106, %s107
    %p121 = scmp.eq.s32.totalorder %s15, 1
    %p122 = por %p120, %p121
    %p124 = scmp.ne.s32.totalorder %s107, %s123
    %p125 = scmp.eq.s32.totalorder %s15, 0
    %p126 = por %p124, %p125
    %p127 = scmp.le.s32.totalorder 1, %s9
    %p128 = scmp.lt.s32.totalorder %s9, 3
    %p129 = pnand %p127, %p128
    %p130 = pneg %p129
    // Predicated region
    $region9: #{conv_bn_relu.1} parent=5 // pred_check
      _
    $region10: #{conv_bn_relu.1} parent=5 // pred_check_branch
      %132 = sbr.rel (%p129) target = $region12
    $region11: #{conv_bn_relu.1} parent=5 // pred_region
      %s133 = ssub.s32 %s9, 1
      // Predicated region
      $region13: #{conv_bn_relu.1} parent=11 // pred_check
        %p134 = pneg %p70
      $region14: #{conv_bn_relu.1} parent=11 // pred_check_branch
        %136 = sbr.rel (%p134) target = $region16
      $region15: #{conv_bn_relu.1} parent=11 // pred_region
        _
      $region16: #{conv_bn_relu.1} parent=11 // pred_fallthru
        _
      // Predicated region
      $region17: #{conv_bn_relu.1} parent=11 // pred_check
        %p137 = pneg %p91
      $region18: #{conv_bn_relu.1} parent=11 // pred_check_branch
        %139 = sbr.rel (%p137) target = $region20
      $region19: #{conv_bn_relu.1} parent=11 // pred_region
        _
      $region20: #{conv_bn_relu.1} parent=11 // pred_fallthru
        _
    $region12: #{conv_bn_relu.1} parent=5 // pred_fallthru
      _
    %p140 = scmp.lt.s32.totalorder %s9, 2
    // Predicated region
    $region21: #{conv_bn_relu.1} parent=5 // pred_check
      %p141 = pneg %p140
    $region22: #{conv_bn_relu.1} parent=5 // pred_check_branch
      %143 = sbr.rel (%p141) target = $region24
    $region23: #{conv_bn_relu.1} parent=5 // pred_region
      // Predicated region
      $region25: #{conv_bn_relu.1} parent=23 // pred_check
        %p144 = pneg %p43
      $region26: #{conv_bn_relu.1} parent=23 // pred_check_branch
        %146 = sbr.rel (%p144) target = $region28
      $region27: #{conv_bn_relu.1} parent=23 // pred_region
        %s147 = smul.u32 2, %s17
        %p148 = scmp.lt.s32.totalorder %s16, 1
        %s149 = scalar_select %p148, %s16, 1
        %p150 = scmp.lt.s32.totalorder %s147, 1
        %s151 = scalar_select %p150, %s147, 1
        %s152 = smul.addr %s149, 62
        %s153 = sadd.s32 %s151, %s152
        %s154 = smul.addr %s153, 8
        %s155 = scalar_lea.vmem %s0, %s154
        %s156 = smul.u32 2, %s17
      $region28: #{conv_bn_relu.1} parent=23 // pred_fallthru
        _
    $region24: #{conv_bn_relu.1} parent=5 // pred_fallthru
      _
    %p157 = scmp.le.s32.totalorder 1, %s9
    %p158 = scmp.lt.s32.totalorder %s9, 3
    %p159 = pnand %p157, %p158
    %p160 = pneg %p159
    // Predicated region
    $region29: #{conv_bn_relu.1} parent=5 // pred_check
      _
    $region30: #{conv_bn_relu.1} parent=5 // pred_check_branch
      %162 = sbr.rel (%p159) target = $region32
    $region31: #{conv_bn_relu.1} parent=5 // pred_region
      %s163 = ssub.s32 %s9, 1
      %s164 = smul.u32 2, %s19
      %p165 = scmp.lt.s32.totalorder %s18, 1
      %s166 = scalar_select %p165, %s18, 1
      %p167 = scmp.lt.s32.totalorder %s164, 1
      %s168 = scalar_select %p167, %s164, 1
      %s169 = smul.addr %s166, 62
      %s170 = sadd.s32 %s168, %s169
      %s171 = smul.addr %s170, 8
      %s172 = scalar_lea.vmem %s0, %s171
      %p173 = pneg %p49
      %p174 = pneg %p46
      %p175 = pneg %p70
      %p176 = pneg %p67
      %p177 = pneg %p91
      %p178 = pneg %p88
      %p179 = pneg %p119
      %p180 = pneg %p116
      %s181 = smul.u32 2, %s19
      %p182 = scmp.lt.s32.totalorder %s18, 1
      %s183 = scalar_select %p182, %s18, 1
      %p184 = scmp.lt.s32.totalorder %s181, 1
      %s185 = scalar_select %p184, %s181, 1
      %s186 = smul.addr %s183, 62
      %s187 = sadd.s32 %s185, %s186
      %s188 = smul.addr %s187, 8
      %s189 = scalar_lea.vmem %s3, %s188
      %s190 = smul.u32 2, %s19
      %p191 = scmp.lt.s32.totalorder %s18, 1
      %s192 = scalar_select %p191, %s18, 1
      %p193 = scmp.lt.s32.totalorder %s190, 1
      %s194 = scalar_select %p193, %s190, 1
      %s195 = smul.addr %s192, 62
      %s196 = sadd.s32 %s194, %s195
      %s197 = smul.addr %s196, 8
      %s198 = scalar_lea.vmem %s0, %s197
      %s199 = smul.u32 2, %s19
      %s200 = smul.u32 2, %s19
      %p201 = scmp.lt.s32.totalorder %s18, 1
      %s202 = scalar_select %p201, %s18, 1
      %p203 = scmp.lt.s32.totalorder %s200, 1
      %s204 = scalar_select %p203, %s200, 1
      %s205 = smul.addr %s202, 62
      %s206 = sadd.s32 %s204, %s205
      %s207 = smul.addr %s206, 8
      %s208 = scalar_lea.vmem %s3, %s207
      %s209 = smul.u32 2, %s19
      %v210 = vld [vmem:[%s198] sm:$0xff]
      %v211 = vld [vmem:[%s198 + $0x8] sm:$0xff]
      %v212 = vld [vmem:[%s198 + $0x10] sm:$0xff]
      %v213 = vld [vmem:[%s198 + $0x18] sm:$0xff]
      %v214 = vld [vmem:[%s198 + $0x20] sm:$0xff]
      %v215 = vld [vmem:[%s198 + $0x28] sm:$0xff]
      %v216 = vld [vmem:[%s198 + $0x30] sm:$0xff]
      %v217 = vld [vmem:[%s198 + $0x38] sm:$0xff]
      %v218 = vld [vmem:[%s198 + $0x40] sm:$0xff]
      %v219 = vld [vmem:[%s198 + $0x48] sm:$0xff]
      %v220 = vld [vmem:[%s198 + $0x50] sm:$0xff]
      %v221 = vld [vmem:[%s198 + $0x58] sm:$0xff]
      %v222 = vld [vmem:[%s198 + $0x60] sm:$0xff]
      %v223 = vld [vmem:[%s198 + $0x68] sm:$0xff]
      %v224 = vld [vmem:[%s198 + $0x70] sm:$0xff]
      %v225 = vld [vmem:[%s198 + $0x78] sm:$0xff]
      %v226 = vld [vmem:[%s198 + $0x80] sm:$0xff]
      %v227 = vld [vmem:[%s198 + $0x88] sm:$0xff]
      %v228 = vld [vmem:[%s198 + $0x90] sm:$0xff]
      %v229 = vld [vmem:[%s198 + $0x98] sm:$0xff]
      %v230 = vld [vmem:[%s198 + $0xa0] sm:$0xff]
      %v231 = vld [vmem:[%s198 + $0xa8] sm:$0xff]
      %v232 = vld [vmem:[%s198 + $0xb0] sm:$0xff]
      %v233 = vld [vmem:[%s198 + $0xb8] sm:$0xff]
      %v234 = vld [vmem:[%s198 + $0xc0] sm:$0xff]
      %v235 = vld [vmem:[%s198 + $0xc8] sm:$0xff]
      %v236 = vld [vmem:[%s198 + $0xd0] sm:$0xff]
      %v237 = vld [vmem:[%s198 + $0xd8] sm:$0xff]
      %v238 = vld [vmem:[%s198 + $0xe0] sm:$0xff]
      %v239 = vld [vmem:[%s198 + $0xe8] sm:$0xff]
      %v240 = vld [vmem:[%s198 + $0xf0] sm:$0xff]
      %v241 = vld [vmem:[%s198 + $0xf8] sm:$0xff]
      %v242 = vld [vmem:[%s198 + $0x100] sm:$0xff]
      %v243 = vld [vmem:[%s198 + $0x108] sm:$0xff]
      %v244 = vld [vmem:[%s198 + $0x110] sm:$0xff]
      %v245 = vld [vmem:[%s198 + $0x118] sm:$0xff]
      %v246 = vld [vmem:[%s198 + $0x120] sm:$0xff]
      %v247 = vld [vmem:[%s198 + $0x128] sm:$0xff]
      %v248 = vld [vmem:[%s198 + $0x130] sm:$0xff]
      %v249 = vld [vmem:[%s198 + $0x138] sm:$0xff]
      %v250 = vld [vmem:[%s198 + $0x140] sm:$0xff]
      %v251 = vld [vmem:[%s198 + $0x148] sm:$0xff]
      %v252 = vld [vmem:[%s198 + $0x150] sm:$0xff]
      %v253 = vld [vmem:[%s198 + $0x158] sm:$0xff]
      %v254 = vld [vmem:[%s198 + $0x160] sm:$0xff]
      %v255 = vld [vmem:[%s198 + $0x168] sm:$0xff]
      %v256 = vld [vmem:[%s198 + $0x170] sm:$0xff]
      %v257 = vld [vmem:[%s198 + $0x178] sm:$0xff]
      %v258 = vld [vmem:[%s198 + $0x180] sm:$0xff]
      %v259 = vld [vmem:[%s198 + $0x188] sm:$0xff]
      %v260 = vld [vmem:[%s198 + $0x190] sm:$0xff]
      %v261 = vld [vmem:[%s198 + $0x198] sm:$0xff]
      %v262 = vld [vmem:[%s198 + $0x1a0] sm:$0xff]
      %v263 = vld [vmem:[%s198 + $0x1a8] sm:$0xff]
      %v264 = vld [vmem:[%s198 + $0x1b0] sm:$0xff]
      %v265 = vld [vmem:[%s198 + $0x1b8] sm:$0xff]
      %v266 = vld [vmem:[%s198 + $0x1c0] sm:$0xff]
      %v267 = vld [vmem:[%s198 + $0x1c8] sm:$0xff]
      %v268 = vld [vmem:[%s198 + $0x1d0] sm:$0xff]
      %v269 = vld [vmem:[%s198 + $0x1d8] sm:$0xff]
      %v270 = vld [vmem:[%s198 + $0x1e0] sm:$0xf]
      %v271 = vld [vmem:[%s198 + $0x1e8] sm:$0xf]
      %v272 = vpack.c.bf16 %v212, %v210
      %v273 = vpack.c.bf16 %v213, %v211
      %v274 = vpack.c.bf16 %v216, %v214
      %v275 = vpack.c.bf16 %v217, %v215
      %v276 = vpack.c.bf16 %v220, %v218
      %v277 = vpack.c.bf16 %v221, %v219
      %v278 = vpack.c.bf16 %v224, %v222
      %v279 = vpack.c.bf16 %v225, %v223
      %v280 = vpack.c.bf16 %v228, %v226
      %v281 = vpack.c.bf16 %v229, %v227
      %v282 = vpack.c.bf16 %v232, %v230
      %v283 = vpack.c.bf16 %v233, %v231
      %v284 = vpack.c.bf16 %v236, %v234
      %v285 = vpack.c.bf16 %v237, %v235
      %v286 = vpack.c.bf16 %v240, %v238
      %v287 = vpack.c.bf16 %v241, %v239
      %v288 = vpack.c.bf16 %v244, %v242
      %v289 = vpack.c.bf16 %v245, %v243
      %v290 = vpack.c.bf16 %v248, %v246
      %v291 = vpack.c.bf16 %v249, %v247
      %v292 = vpack.c.bf16 %v252, %v250
      %v293 = vpack.c.bf16 %v253, %v251
      %v294 = vpack.c.bf16 %v256, %v254
      %v295 = vpack.c.bf16 %v257, %v255
      %v296 = vpack.c.bf16 %v260, %v258
      %v297 = vpack.c.bf16 %v261, %v259
      %v298 = vpack.c.bf16 %v264, %v262
      %v299 = vpack.c.bf16 %v265, %v263
      %v300 = vpack.c.bf16 %v268, %v266
      %v301 = vpack.c.bf16 %v269, %v267
      %v302 = vpack.c.bf16 %v270, %v270
      %v303 = vpack.c.bf16 %v271, %v271
      %v304 = vld [vmem:[%s1] sm:$0xff]
      %v305 = vld [vmem:[%s1 + $0x8] sm:$0xff]
      %v306 = vld [vmem:[%s1 + $0x10] sm:$0xff]
      %v307 = vld [vmem:[%s1 + $0x18] sm:$0xff]
      %v308 = vld [vmem:[%s1 + $0x20] sm:$0xff]
      %v309 = vld [vmem:[%s1 + $0x28] sm:$0xff]
      %v310 = vld [vmem:[%s1 + $0x30] sm:$0xff]
      %v311 = vld [vmem:[%s1 + $0x38] sm:$0xff]
      %v312 = vld [vmem:[%s1 + $0x40] sm:$0xff]
      %v313 = vld [vmem:[%s1 + $0x48] sm:$0xff]
      %v314 = vld [vmem:[%s1 + $0x50] sm:$0xff]
      %v315 = vld [vmem:[%s1 + $0x58] sm:$0xff]
      %v316 = vld [vmem:[%s1 + $0x60] sm:$0xff]
      %v317 = vld [vmem:[%s1 + $0x68] sm:$0xff]
      %v318 = vld [vmem:[%s1 + $0x70] sm:$0xff]
      %v319 = vld [vmem:[%s1 + $0x78] sm:$0xff]
      %v320 = vld [vmem:[%s1 + $0x80] sm:$0xff]
      %v321 = vld [vmem:[%s1 + $0x88] sm:$0xff]
      %v322 = vld [vmem:[%s1 + $0x90] sm:$0xff]
      %v323 = vld [vmem:[%s1 + $0x98] sm:$0xff]
      %v324 = vld [vmem:[%s1 + $0xa0] sm:$0xff]
      %v325 = vld [vmem:[%s1 + $0xa8] sm:$0xff]
      %v326 = vld [vmem:[%s1 + $0xb0] sm:$0xff]
      %v327 = vld [vmem:[%s1 + $0xb8] sm:$0xff]
      %v328 = vld [vmem:[%s1 + $0xc0] sm:$0xff]
      %v329 = vld [vmem:[%s1 + $0xc8] sm:$0xff]
      %v330 = vld [vmem:[%s1 + $0xd0] sm:$0xff]
      %v331 = vld [vmem:[%s1 + $0xd8] sm:$0xff]
      %v332 = vld [vmem:[%s1 + $0xe0] sm:$0xff]
      %v333 = vld [vmem:[%s1 + $0xe8] sm:$0xff]
      %v334 = vld [vmem:[%s1 + $0xf0] sm:$0x33]
      %v335 = vld [vmem:[%s2] sm:$0xff]
      %v336 = vld [vmem:[%s2 + $0x8] sm:$0xff]
      %v337 = vld [vmem:[%s2 + $0x10] sm:$0xff]
      %v338 = vld [vmem:[%s2 + $0x18] sm:$0xff]
      %v339 = vld [vmem:[%s2 + $0x20] sm:$0xff]
      %v340 = vld [vmem:[%s2 + $0x28] sm:$0xff]
      %v341 = vld [vmem:[%s2 + $0x30] sm:$0xff]
      %v342 = vld [vmem:[%s2 + $0x38] sm:$0xff]
      %v343 = vld [vmem:[%s2 + $0x40] sm:$0xff]
      %v344 = vld [vmem:[%s2 + $0x48] sm:$0xff]
      %v345 = vld [vmem:[%s2 + $0x50] sm:$0xff]
      %v346 = vld [vmem:[%s2 + $0x58] sm:$0xff]
      %v347 = vld [vmem:[%s2 + $0x60] sm:$0xff]
      %v348 = vld [vmem:[%s2 + $0x68] sm:$0xff]
      %v349 = vld [vmem:[%s2 + $0x70] sm:$0xff]
      %v350 = vld [vmem:[%s2 + $0x78] sm:$0xff]
      %v351 = vld [vmem:[%s2 + $0x80] sm:$0xff]
      %v352 = vld [vmem:[%s2 + $0x88] sm:$0xff]
      %v353 = vld [vmem:[%s2 + $0x90] sm:$0xff]
      %v354 = vld [vmem:[%s2 + $0x98] sm:$0xff]
      %v355 = vld [vmem:[%s2 + $0xa0] sm:$0xff]
      %v356 = vld [vmem:[%s2 + $0xa8] sm:$0xff]
      %v357 = vld [vmem:[%s2 + $0xb0] sm:$0xff]
      %v358 = vld [vmem:[%s2 + $0xb8] sm:$0xff]
      %v359 = vld [vmem:[%s2 + $0xc0] sm:$0xff]
      %v360 = vld [vmem:[%s2 + $0xc8] sm:$0xff]
      %v361 = vld [vmem:[%s2 + $0xd0] sm:$0xff]
      %v362 = vld [vmem:[%s2 + $0xd8] sm:$0xff]
      %v363 = vld [vmem:[%s2 + $0xe0] sm:$0xff]
      %v364 = vld [vmem:[%s2 + $0xe8] sm:$0xff]
      %v365 = vld [vmem:[%s2 + $0xf0] sm:$0xf]
      %367 = vset.pattern.permute.xlu0 0
      %368 = vperm.xlu0 %367, %v335
      %v369 = vpop.permute.xlu0 %368
      %372 = vset.pattern.permute.xlu0 0
      %373 = vperm.xlu0 %372, %v336
      %v374 = vpop.permute.xlu0 %373
      %377 = vset.pattern.permute.xlu0 0
      %378 = vperm.xlu0 %377, %v337
      %v379 = vpop.permute.xlu0 %378
      %382 = vset.pattern.permute.xlu0 0
      %383 = vperm.xlu0 %382, %v338
      %v384 = vpop.permute.xlu0 %383
      %387 = vset.pattern.permute.xlu0 0
      %388 = vperm.xlu0 %387, %v339
      %v389 = vpop.permute.xlu0 %388
      %392 = vset.pattern.permute.xlu0 0
      %393 = vperm.xlu0 %392, %v340
      %v394 = vpop.permute.xlu0 %393
      %397 = vset.pattern.permute.xlu0 0
      %398 = vperm.xlu0 %397, %v341
      %v399 = vpop.permute.xlu0 %398
      %402 = vset.pattern.permute.xlu0 0
      %403 = vperm.xlu0 %402, %v342
      %v404 = vpop.permute.xlu0 %403
      %407 = vset.pattern.permute.xlu0 0
      %408 = vperm.xlu0 %407, %v343
      %v409 = vpop.permute.xlu0 %408
      %412 = vset.pattern.permute.xlu0 0
      %413 = vperm.xlu0 %412, %v344
      %v414 = vpop.permute.xlu0 %413
      %417 = vset.pattern.permute.xlu0 0
      %418 = vperm.xlu0 %417, %v345
      %v419 = vpop.permute.xlu0 %418
      %422 = vset.pattern.permute.xlu0 0
      %423 = vperm.xlu0 %422, %v346
      %v424 = vpop.permute.xlu0 %423
      %427 = vset.pattern.permute.xlu0 0
      %428 = vperm.xlu0 %427, %v347
      %v429 = vpop.permute.xlu0 %428
      %432 = vset.pattern.permute.xlu0 0
      %433 = vperm.xlu0 %432, %v348
      %v434 = vpop.permute.xlu0 %433
      %437 = vset.pattern.permute.xlu0 0
      %438 = vperm.xlu0 %437, %v349
      %v439 = vpop.permute.xlu0 %438
      %442 = vset.pattern.permute.xlu0 0
      %443 = vperm.xlu0 %442, %v350
      %v444 = vpop.permute.xlu0 %443
      %447 = vset.pattern.permute.xlu0 0
      %448 = vperm.xlu0 %447, %v351
      %v449 = vpop.permute.xlu0 %448
      %452 = vset.pattern.permute.xlu0 0
      %453 = vperm.xlu0 %452, %v352
      %v454 = vpop.permute.xlu0 %453
      %457 = vset.pattern.permute.xlu0 0
      %458 = vperm.xlu0 %457, %v353
      %v459 = vpop.permute.xlu0 %458
      %462 = vset.pattern.permute.xlu0 0
      %463 = vperm.xlu0 %462, %v354
      %v464 = vpop.permute.xlu0 %463
      %467 = vset.pattern.permute.xlu0 0
      %468 = vperm.xlu0 %467, %v355
      %v469 = vpop.permute.xlu0 %468
      %472 = vset.pattern.permute.xlu0 0
      %473 = vperm.xlu0 %472, %v356
      %v474 = vpop.permute.xlu0 %473
      %477 = vset.pattern.permute.xlu0 0
      %478 = vperm.xlu0 %477, %v357
      %v479 = vpop.permute.xlu0 %478
      %482 = vset.pattern.permute.xlu0 0
      %483 = vperm.xlu0 %482, %v358
      %v484 = vpop.permute.xlu0 %483
      %487 = vset.pattern.permute.xlu0 0
      %488 = vperm.xlu0 %487, %v359
      %v489 = vpop.permute.xlu0 %488
      %492 = vset.pattern.permute.xlu0 0
      %493 = vperm.xlu0 %492, %v360
      %v494 = vpop.permute.xlu0 %493
      %497 = vset.pattern.permute.xlu0 0
      %498 = vperm.xlu0 %497, %v361
      %v499 = vpop.permute.xlu0 %498
      %502 = vset.pattern.permute.xlu0 0
      %503 = vperm.xlu0 %502, %v362
      %v504 = vpop.permute.xlu0 %503
      %507 = vset.pattern.permute.xlu0 0
      %508 = vperm.xlu0 %507, %v363
      %v509 = vpop.permute.xlu0 %508
      %512 = vset.pattern.permute.xlu0 0
      %513 = vperm.xlu0 %512, %v364
      %v514 = vpop.permute.xlu0 %513
      %517 = vset.pattern.permute.xlu0 0
      %518 = vperm.xlu0 %517, %v365
      %v519 = vpop.permute.xlu0 %518
      %v552 = vunpack.c.l.b16 %v304
      %v553 = vunpack.c.h.b16 %v304
      %v554 = vunpack.c.l.b16 %v305
      %v555 = vunpack.c.h.b16 %v305
      %v556 = vunpack.c.l.b16 %v306
      %v557 = vunpack.c.h.b16 %v306
      %v558 = vunpack.c.l.b16 %v307
      %v559 = vunpack.c.h.b16 %v307
      %v560 = vunpack.c.l.b16 %v308
      %v561 = vunpack.c.h.b16 %v308
      %v562 = vunpack.c.l.b16 %v309
      %v563 = vunpack.c.h.b16 %v309
      %v564 = vunpack.c.l.b16 %v310
      %v565 = vunpack.c.h.b16 %v310
      %v566 = vunpack.c.l.b16 %v311
      %v567 = vunpack.c.h.b16 %v311
      %v568 = vunpack.c.l.b16 %v312
      %v569 = vunpack.c.h.b16 %v312
      %v570 = vunpack.c.l.b16 %v313
      %v571 = vunpack.c.h.b16 %v313
      %v572 = vunpack.c.l.b16 %v314
      %v573 = vunpack.c.h.b16 %v314
      %v574 = vunpack.c.l.b16 %v315
      %v575 = vunpack.c.h.b16 %v315
      %v576 = vunpack.c.l.b16 %v316
      %v577 = vunpack.c.h.b16 %v316
      %v578 = vunpack.c.l.b16 %v317
      %v579 = vunpack.c.h.b16 %v317
      %v580 = vunpack.c.l.b16 %v318
      %v581 = vunpack.c.h.b16 %v318
      %v582 = vunpack.c.l.b16 %v319
      %v583 = vunpack.c.h.b16 %v319
      %v584 = vunpack.c.l.b16 %v320
      %v585 = vunpack.c.h.b16 %v320
      %v586 = vunpack.c.l.b16 %v321
      %v587 = vunpack.c.h.b16 %v321
      %v588 = vunpack.c.l.b16 %v322
      %v589 = vunpack.c.h.b16 %v322
      %v590 = vunpack.c.l.b16 %v323
      %v591 = vunpack.c.h.b16 %v323
      %v592 = vunpack.c.l.b16 %v324
      %v593 = vunpack.c.h.b16 %v324
      %v594 = vunpack.c.l.b16 %v325
      %v595 = vunpack.c.h.b16 %v325
      %v596 = vunpack.c.l.b16 %v326
      %v597 = vunpack.c.h.b16 %v326
      %v598 = vunpack.c.l.b16 %v327
      %v599 = vunpack.c.h.b16 %v327
      %v600 = vunpack.c.l.b16 %v328
      %v601 = vunpack.c.h.b16 %v328
      %v602 = vunpack.c.l.b16 %v329
      %v603 = vunpack.c.h.b16 %v329
      %v604 = vunpack.c.l.b16 %v330
      %v605 = vunpack.c.h.b16 %v330
      %v606 = vunpack.c.l.b16 %v331
      %v607 = vunpack.c.h.b16 %v331
      %v608 = vunpack.c.l.b16 %v332
      %v609 = vunpack.c.h.b16 %v332
      %v610 = vunpack.c.l.b16 %v333
      %v611 = vunpack.c.h.b16 %v333
      %v612 = vunpack.c.l.b16 %v334
      %v613 = vunpack.c.h.b16 %v334
      %v614 = vpack.c.b16 %v554, %v552
      %v615 = vpack.c.b16 %v555, %v553
      %v616 = vpack.c.b16 %v558, %v556
      %v617 = vpack.c.b16 %v559, %v557
      %v618 = vpack.c.b16 %v562, %v560
      %v619 = vpack.c.b16 %v563, %v561
      %v620 = vpack.c.b16 %v566, %v564
      %v621 = vpack.c.b16 %v567, %v565
      %v622 = vpack.c.b16 %v570, %v568
      %v623 = vpack.c.b16 %v571, %v569
      %v624 = vpack.c.b16 %v574, %v572
      %v625 = vpack.c.b16 %v575, %v573
      %v626 = vpack.c.b16 %v578, %v576
      %v627 = vpack.c.b16 %v579, %v577
      %v628 = vpack.c.b16 %v582, %v580
      %v629 = vpack.c.b16 %v583, %v581
      %v630 = vpack.c.b16 %v586, %v584
      %v631 = vpack.c.b16 %v587, %v585
      %v632 = vpack.c.b16 %v590, %v588
      %v633 = vpack.c.b16 %v591, %v589
      %v634 = vpack.c.b16 %v594, %v592
      %v635 = vpack.c.b16 %v595, %v593
      %v636 = vpack.c.b16 %v598, %v596
      %v637 = vpack.c.b16 %v599, %v597
      %v638 = vpack.c.b16 %v602, %v600
      %v639 = vpack.c.b16 %v603, %v601
      %v640 = vpack.c.b16 %v606, %v604
      %v641 = vpack.c.b16 %v607, %v605
      %v642 = vpack.c.b16 %v610, %v608
      %v643 = vpack.c.b16 %v611, %v609
      %v644 = vpack.c.b16 %v612, %v612
      %v645 = vpack.c.b16 %v613, %v613
      %vm662 = vcmask 949248
      %v664 = vsel %vm662, %v615, 0
      %v667 = vsel %vm662, %v617, 0
      %v670 = vsel %vm662, %v619, 0
      %v673 = vsel %vm662, %v621, 0
      %v676 = vsel %vm662, %v623, 0
      %v679 = vsel %vm662, %v625, 0
      %v682 = vsel %vm662, %v627, 0
      %v685 = vsel %vm662, %v629, 0
      %v688 = vsel %vm662, %v631, 0
      %v691 = vsel %vm662, %v633, 0
      %v694 = vsel %vm662, %v635, 0
      %v697 = vsel %vm662, %v637, 0
      %v700 = vsel %vm662, %v639, 0
      %v703 = vsel %vm662, %v641, 0
      %v706 = vsel %vm662, %v643, 0
      %v709 = vsel %vm662, %v645, 0
      %vm711 = vcmask 1041408
      %v713 = vsel %vm711, %v302, 0
      %v716 = vsel %vm711, %v303, 0
      %718 = vmatprep.subr.bf16.mxu0 %v273
      %719 = vmatpush1.bf16.msra.mxu0 %v272
      %720 = vmatprep.subr.bf16.mxu0 %v275
      %721 = vmatpush1.bf16.msra.mxu0 %v274
      %722 = vmatprep.subr.bf16.mxu0 %v277
      %723 = vmatpush1.bf16.msra.mxu0 %v276
      %724 = vmatprep.subr.bf16.mxu0 %v279
      %725 = vmatpush1.bf16.msra.mxu0 %v278
      %726 = vmatprep.subr.bf16.mxu0 %v281
      %727 = vmatpush1.bf16.msra.mxu0 %v280
      %728 = vmatprep.subr.bf16.mxu0 %v283
      %729 = vmatpush1.bf16.msra.mxu0 %v282
      %730 = vmatprep.subr.bf16.mxu0 %v285
      %731 = vmatpush1.bf16.msra.mxu0 %v284
      %732 = vmatprep.subr.bf16.mxu0 %v287
      %733 = vmatpush1.bf16.msra.mxu0 %v286
      %734 = vmatprep.subr.bf16.mxu0 %v289
      %735 = vmatpush1.bf16.msra.mxu0 %v288
      %736 = vmatprep.subr.bf16.mxu0 %v291
      %737 = vmatpush1.bf16.msra.mxu0 %v290
      %738 = vmatprep.subr.bf16.mxu0 %v293
      %739 = vmatpush1.bf16.msra.mxu0 %v292
      %740 = vmatprep.subr.bf16.mxu0 %v295
      %741 = vmatpush1.bf16.msra.mxu0 %v294
      %742 = vmatprep.subr.bf16.mxu0 %v297
      %743 = vmatpush1.bf16.msra.mxu0 %v296
      %744 = vmatprep.subr.bf16.mxu0 %v299
      %745 = vmatpush1.bf16.msra.mxu0 %v298
      %746 = vmatprep.subr.bf16.mxu0 %v301
      %747 = vmatpush1.bf16.msra.mxu0 %v300
      %748 = vmatprep.subr.bf16.mxu0 %v716
      %749 = vmatpush1.bf16.msra.mxu0 %v713
      %750 = vmatprep.mubr.bf16.mxu0 %v664
      %751 = vmatmul.mubr.bf16.gmra.mrb[0].mxu0 %v614
      %v752 = vpop.f32.mrb[0].mxu0
      %v753 = vadd.f32 %v369, %v752
      %v754 = vpop.f32.mrb[0].mxu0
      %v755 = vadd.f32 %v369, %v754
      %v756 = vpop.f32.mrb[0].mxu0
      %v757 = vadd.f32 %v374, %v756
      %v758 = vpop.f32.mrb[0].mxu0
      %v759 = vadd.f32 %v374, %v758
      %760 = vmatprep.mubr.bf16.mxu0 %v667
      %761 = vmatmul.mubr.bf16.gmra.mrb[0].mxu0 %v616
      %v762 = vpop.f32.mrb[0].mxu0
      %v763 = vadd.f32 %v379, %v762
      %v764 = vpop.f32.mrb[0].mxu0
      %v765 = vadd.f32 %v379, %v764
      %v766 = vpop.f32.mrb[0].mxu0
      %v767 = vadd.f32 %v384, %v766
      %v768 = vpop.f32.mrb[0].mxu0
      %v769 = vadd.f32 %v384, %v768
      %770 = vmatprep.mubr.bf16.mxu0 %v670
      %771 = vmatmul.mubr.bf16.gmra.mrb[0].mxu0 %v618
      %v772 = vpop.f32.mrb[0].mxu0
      %v773 = vadd.f32 %v389, %v772
      %v774 = vpop.f32.mrb[0].mxu0
      %v775 = vadd.f32 %v389, %v774
      %v776 = vpop.f32.mrb[0].mxu0
      %v777 = vadd.f32 %v394, %v776
      %v778 = vpop.f32.mrb[0].mxu0
      %v779 = vadd.f32 %v394, %v778
      %780 = vmatprep.mubr.bf16.mxu0 %v673
      %781 = vmatmul.mubr.bf16.gmra.mrb[0].mxu0 %v620
      %v782 = vpop.f32.mrb[0].mxu0
      %v783 = vadd.f32 %v399, %v782
      %v784 = vpop.f32.mrb[0].mxu0
      %v785 = vadd.f32 %v399, %v784
      %v786 = vpop.f32.mrb[0].mxu0
      %v787 = vadd.f32 %v404, %v786
      %v788 = vpop.f32.mrb[0].mxu0
      %v789 = vadd.f32 %v404, %v788
      %790 = vmatprep.mubr.bf16.mxu0 %v676
      %791 = vmatmul.mubr.bf16.gmra.mrb[0].mxu0 %v622
      %v792 = vpop.f32.mrb[0].mxu0
      %v793 = vadd.f32 %v409, %v792
      %v794 = vpop.f32.mrb[0].mxu0
      %v795 = vadd.f32 %v409, %v794
      %v796 = vpop.f32.mrb[0].mxu0
      %v797 = vadd.f32 %v414, %v796
      %v798 = vpop.f32.mrb[0].mxu0
      %v799 = vadd.f32 %v414, %v798
      %800 = vmatprep.mubr.bf16.mxu0 %v679
      %801 = vmatmul.mubr.bf16.gmra.mrb[0].mxu0 %v624
      %v802 = vpop.f32.mrb[0].mxu0
      %v803 = vadd.f32 %v419, %v802
      %v804 = vpop.f32.mrb[0].mxu0
      %v805 = vadd.f32 %v419, %v804
      %v806 = vpop.f32.mrb[0].mxu0
      %v807 = vadd.f32 %v424, %v806
      %v808 = vpop.f32.mrb[0].mxu0
      %v809 = vadd.f32 %v424, %v808
      %810 = vmatprep.mubr.bf16.mxu0 %v682
      %811 = vmatmul.mubr.bf16.gmra.mrb[0].mxu0 %v626
      %v812 = vpop.f32.mrb[0].mxu0
      %v813 = vadd.f32 %v429, %v812
      %v814 = vpop.f32.mrb[0].mxu0
      %v815 = vadd.f32 %v429, %v814
      %v816 = vpop.f32.mrb[0].mxu0
      %v817 = vadd.f32 %v434, %v816
      %v818 = vpop.f32.mrb[0].mxu0
      %v819 = vadd.f32 %v434, %v818
      %820 = vmatprep.mubr.bf16.mxu0 %v685
      %821 = vmatmul.mubr.bf16.gmra.mrb[0].mxu0 %v628
      %v822 = vpop.f32.mrb[0].mxu0
      %v823 = vadd.f32 %v439, %v822
      %v824 = vpop.f32.mrb[0].mxu0
      %v825 = vadd.f32 %v439, %v824
      %v826 = vpop.f32.mrb[0].mxu0
      %v827 = vadd.f32 %v444, %v826
      %v828 = vpop.f32.mrb[0].mxu0
      %v829 = vadd.f32 %v444, %v828
      %830 = vmatprep.mubr.bf16.mxu0 %v688
      %831 = vmatmul.mubr.bf16.gmra.mrb[0].mxu0 %v630
      %v832 = vpop.f32.mrb[0].mxu0
      %v833 = vadd.f32 %v449, %v832
      %v834 = vpop.f32.mrb[0].mxu0
      %v835 = vadd.f32 %v449, %v834
      %v836 = vpop.f32.mrb[0].mxu0
      %v837 = vadd.f32 %v454, %v836
      %v838 = vpop.f32.mrb[0].mxu0
      %v839 = vadd.f32 %v454, %v838
      %840 = vmatprep.mubr.bf16.mxu0 %v691
      %841 = vmatmul.mubr.bf16.gmra.mrb[0].mxu0 %v632
      %v842 = vpop.f32.mrb[0].mxu0
      %v843 = vadd.f32 %v459, %v842
      %v844 = vpop.f32.mrb[0].mxu0
      %v845 = vadd.f32 %v459, %v844
      %v846 = vpop.f32.mrb[0].mxu0
      %v847 = vadd.f32 %v464, %v846
      %v848 = vpop.f32.mrb[0].mxu0
      %v849 = vadd.f32 %v464, %v848
      %850 = vmatprep.mubr.bf16.mxu0 %v694
      %851 = vmatmul.mubr.bf16.gmra.mrb[0].mxu0 %v634
      %v852 = vpop.f32.mrb[0].mxu0
      %v853 = vadd.f32 %v469, %v852
      %v854 = vpop.f32.mrb[0].mxu0
      %v855 = vadd.f32 %v469, %v854
      %v856 = vpop.f32.mrb[0].mxu0
      %v857 = vadd.f32 %v474, %v856
      %v858 = vpop.f32.mrb[0].mxu0
      %v859 = vadd.f32 %v474, %v858
      %860 = vmatprep.mubr.bf16.mxu0 %v697
      %861 = vmatmul.mubr.bf16.gmra.mrb[0].mxu0 %v636
      %v862 = vpop.f32.mrb[0].mxu0
      %v863 = vadd.f32 %v479, %v862
      %v864 = vpop.f32.mrb[0].mxu0
      %v865 = vadd.f32 %v479, %v864
      %v866 = vpop.f32.mrb[0].mxu0
      %v867 = vadd.f32 %v484, %v866
      %v868 = vpop.f32.mrb[0].mxu0
      %v869 = vadd.f32 %v484, %v868
      %870 = vmatprep.mubr.bf16.mxu0 %v700
      %871 = vmatmul.mubr.bf16.gmra.mrb[0].mxu0 %v638
      %v872 = vpop.f32.mrb[0].mxu0
      %v873 = vadd.f32 %v489, %v872
      %v874 = vpop.f32.mrb[0].mxu0
      %v875 = vadd.f32 %v489, %v874
      %v876 = vpop.f32.mrb[0].mxu0
      %v877 = vadd.f32 %v494, %v876
      %v878 = vpop.f32.mrb[0].mxu0
      %v879 = vadd.f32 %v494, %v878
      %880 = vmatprep.mubr.bf16.mxu0 %v703
      %881 = vmatmul.mubr.bf16.gmra.mrb[0].mxu0 %v640
      %v882 = vpop.f32.mrb[0].mxu0
      %v883 = vadd.f32 %v499, %v882
      %v884 = vpop.f32.mrb[0].mxu0
      %v885 = vadd.f32 %v499, %v884
      %v886 = vpop.f32.mrb[0].mxu0
      %v887 = vadd.f32 %v504, %v886
      %v888 = vpop.f32.mrb[0].mxu0
      %v889 = vadd.f32 %v504, %v888
      %890 = vmatprep.mubr.bf16.mxu0 %v706
      %891 = vmatmul.mubr.bf16.gmra.mrb[0].mxu0 %v642
      %v892 = vpop.f32.mrb[0].mxu0
      %v893 = vadd.f32 %v509, %v892
      %v894 = vpop.f32.mrb[0].mxu0
      %v895 = vadd.f32 %v509, %v894
      %v896 = vpop.f32.mrb[0].mxu0
      %v897 = vadd.f32 %v514, %v896
      %v898 = vpop.f32.mrb[0].mxu0
      %v899 = vadd.f32 %v514, %v898
      %900 = vmatprep.mubr.bf16.mxu0 %v709
      %901 = vmatmul.mubr.bf16.gmra.mrb[0].mxu0 %v644
      %v902 = vpop.f32.mrb[0].mxu0
      %v903 = vadd.f32 %v519, %v902
      %v904 = vpop.f32.mrb[0].mxu0
      %v905 = vadd.f32 %v519, %v904
      %v906 = vpop.f32.mrb[0].mxu0
      %v907 = vpop.f32.mrb[0].mxu0
      %908 = vdwg.mxu0
      %v909 = vmax.f32 %v753, 0.0
      %v910 = vmax.f32 %v755, 0.0
      %v911 = vmax.f32 %v757, 0.0
      %v912 = vmax.f32 %v759, 0.0
      %v913 = vmax.f32 %v763, 0.0
      %v914 = vmax.f32 %v765, 0.0
      %v915 = vmax.f32 %v767, 0.0
      %v916 = vmax.f32 %v769, 0.0
      %v917 = vmax.f32 %v773, 0.0
      %v918 = vmax.f32 %v775, 0.0
      %v919 = vmax.f32 %v777, 0.0
      %v920 = vmax.f32 %v779, 0.0
      %v921 = vmax.f32 %v783, 0.0
      %v922 = vmax.f32 %v785, 0.0
      %v923 = vmax.f32 %v787, 0.0
      %v924 = vmax.f32 %v789, 0.0
      %v925 = vmax.f32 %v793, 0.0
      %v926 = vmax.f32 %v795, 0.0
      %v927 = vmax.f32 %v797, 0.0
      %v928 = vmax.f32 %v799, 0.0
      %v929 = vmax.f32 %v803, 0.0
      %v930 = vmax.f32 %v805, 0.0
      %v931 = vmax.f32 %v807, 0.0
      %v932 = vmax.f32 %v809, 0.0
      %v933 = vmax.f32 %v813, 0.0
      %v934 = vmax.f32 %v815, 0.0
      %v935 = vmax.f32 %v817, 0.0
      %v936 = vmax.f32 %v819, 0.0
      %v937 = vmax.f32 %v823, 0.0
      %v938 = vmax.f32 %v825, 0.0
      %v939 = vmax.f32 %v827, 0.0
      %v940 = vmax.f32 %v829, 0.0
      %v941 = vmax.f32 %v833, 0.0
      %v942 = vmax.f32 %v835, 0.0
      %v943 = vmax.f32 %v837, 0.0
      %v944 = vmax.f32 %v839, 0.0
      %v945 = vmax.f32 %v843, 0.0
      %v946 = vmax.f32 %v845, 0.0
      %v947 = vmax.f32 %v847, 0.0
      %v948 = vmax.f32 %v849, 0.0
      %v949 = vmax.f32 %v853, 0.0
      %v950 = vmax.f32 %v855, 0.0
      %v951 = vmax.f32 %v857, 0.0
      %v952 = vmax.f32 %v859, 0.0
      %v953 = vmax.f32 %v863, 0.0
      %v954 = vmax.f32 %v865, 0.0
      %v955 = vmax.f32 %v867, 0.0
      %v956 = vmax.f32 %v869, 0.0
      %v957 = vmax.f32 %v873, 0.0
      %v958 = vmax.f32 %v875, 0.0
      %v959 = vmax.f32 %v877, 0.0
      %v960 = vmax.f32 %v879, 0.0
      %v961 = vmax.f32 %v883, 0.0
      %v962 = vmax.f32 %v885, 0.0
      %v963 = vmax.f32 %v887, 0.0
      %v964 = vmax.f32 %v889, 0.0
      %v965 = vmax.f32 %v893, 0.0
      %v966 = vmax.f32 %v895, 0.0
      %v967 = vmax.f32 %v897, 0.0
      %v968 = vmax.f32 %v899, 0.0
      %v969 = vmax.f32 %v903, 0.0
      %v970 = vmax.f32 %v905, 0.0
      %971 = vst [vmem:[%s208] sm:$0xff] %v909
      %972 = vst [vmem:[%s208 + $0x8] sm:$0xff] %v910
      %973 = vst [vmem:[%s208 + $0x10] sm:$0xff] %v911
      %974 = vst [vmem:[%s208 + $0x18] sm:$0xff] %v912
      %975 = vst [vmem:[%s208 + $0x20] sm:$0xff] %v913
      %976 = vst [vmem:[%s208 + $0x28] sm:$0xff] %v914
      %977 = vst [vmem:[%s208 + $0x30] sm:$0xff] %v915
      %978 = vst [vmem:[%s208 + $0x38] sm:$0xff] %v916
      %979 = vst [vmem:[%s208 + $0x40] sm:$0xff] %v917
      %980 = vst [vmem:[%s208 + $0x48] sm:$0xff] %v918
      %981 = vst [vmem:[%s208 + $0x50] sm:$0xff] %v919
      %982 = vst [vmem:[%s208 + $0x58] sm:$0xff] %v920
      %983 = vst [vmem:[%s208 + $0x60] sm:$0xff] %v921
      %984 = vst [vmem:[%s208 + $0x68] sm:$0xff] %v922
      %985 = vst [vmem:[%s208 + $0x70] sm:$0xff] %v923
      %986 = vst [vmem:[%s208 + $0x78] sm:$0xff] %v924
      %987 = vst [vmem:[%s208 + $0x80] sm:$0xff] %v925
      %988 = vst [vmem:[%s208 + $0x88] sm:$0xff] %v926
      %989 = vst [vmem:[%s208 + $0x90] sm:$0xff] %v927
      %990 = vst [vmem:[%s208 + $0x98] sm:$0xff] %v928
      %991 = vst [vmem:[%s208 + $0xa0] sm:$0xff] %v929
      %992 = vst [vmem:[%s208 + $0xa8] sm:$0xff] %v930
      %993 = vst [vmem:[%s208 + $0xb0] sm:$0xff] %v931
      %994 = vst [vmem:[%s208 + $0xb8] sm:$0xff] %v932
      %995 = vst [vmem:[%s208 + $0xc0] sm:$0xff] %v933
      %996 = vst [vmem:[%s208 + $0xc8] sm:$0xff] %v934
      %997 = vst [vmem:[%s208 + $0xd0] sm:$0xff] %v935
      %998 = vst [vmem:[%s208 + $0xd8] sm:$0xff] %v936
      %999 = vst [vmem:[%s208 + $0xe0] sm:$0xff] %v937
      %1000 = vst [vmem:[%s208 + $0xe8] sm:$0xff] %v938
      %1001 = vst [vmem:[%s208 + $0xf0] sm:$0xff] %v939
      %1002 = vst [vmem:[%s208 + $0xf8] sm:$0xff] %v940
      %1003 = vst [vmem:[%s208 + $0x100] sm:$0xff] %v941
      %1004 = vst [vmem:[%s208 + $0x108] sm:$0xff] %v942
      %1005 = vst [vmem:[%s208 + $0x110] sm:$0xff] %v943
      %1006 = vst [vmem:[%s208 + $0x118] sm:$0xff] %v944
      %1007 = vst [vmem:[%s208 + $0x120] sm:$0xff] %v945
      %1008 = vst [vmem:[%s208 + $0x128] sm:$0xff] %v946
      %1009 = vst [vmem:[%s208 + $0x130] sm:$0xff] %v947
      %1010 = vst [vmem:[%s208 + $0x138] sm:$0xff] %v948
      %1011 = vst [vmem:[%s208 + $0x140] sm:$0xff] %v949
      %1012 = vst [vmem:[%s208 + $0x148] sm:$0xff] %v950
      %1013 = vst [vmem:[%s208 + $0x150] sm:$0xff] %v951
      %1014 = vst [vmem:[%s208 + $0x158] sm:$0xff] %v952
      %1015 = vst [vmem:[%s208 + $0x160] sm:$0xff] %v953
      %1016 = vst [vmem:[%s208 + $0x168] sm:$0xff] %v954
      %1017 = vst [vmem:[%s208 + $0x170] sm:$0xff] %v955
      %1018 = vst [vmem:[%s208 + $0x178] sm:$0xff] %v956
      %1019 = vst [vmem:[%s208 + $0x180] sm:$0xff] %v957
      %1020 = vst [vmem:[%s208 + $0x188] sm:$0xff] %v958
      %1021 = vst [vmem:[%s208 + $0x190] sm:$0xff] %v959
      %1022 = vst [vmem:[%s208 + $0x198] sm:$0xff] %v960
      %1023 = vst [vmem:[%s208 + $0x1a0] sm:$0xff] %v961
      %1024 = vst [vmem:[%s208 + $0x1a8] sm:$0xff] %v962
      %1025 = vst [vmem:[%s208 + $0x1b0] sm:$0xff] %v963
      %1026 = vst [vmem:[%s208 + $0x1b8] sm:$0xff] %v964
      %1027 = vst [vmem:[%s208 + $0x1c0] sm:$0xff] %v965
      %1028 = vst [vmem:[%s208 + $0x1c8] sm:$0xff] %v966
      %1029 = vst [vmem:[%s208 + $0x1d0] sm:$0xff] %v967
      %1030 = vst [vmem:[%s208 + $0x1d8] sm:$0xff] %v968
      %1031 = vst [vmem:[%s208 + $0x1e0] sm:$0xf] %v969
      %1032 = vst [vmem:[%s208 + $0x1e8] sm:$0xf] %v970
      %s1033 = smul.u32 2, %s19
      %p1034 = scmp.lt.s32.totalorder %s18, 1
      %s1035 = scalar_select %p1034, %s18, 1
      %p1036 = scmp.lt.s32.totalorder %s1033, 1
      %s1037 = scalar_select %p1036, %s1033, 1
      %s1038 = smul.addr %s1035, 62
      %s1039 = sadd.s32 %s1037, %s1038
      %s1040 = smul.addr %s1039, 8
      %s1041 = scalar_lea.vmem %s3, %s1040
      // Predicated region
      $region33: #{conv_bn_relu.1} parent=31 // pred_check
        %p1042 = pneg %p116
      $region34: #{conv_bn_relu.1} parent=31 // pred_check_branch
        %1044 = sbr.rel (%p1042) target = $region36
      $region35: #{conv_bn_relu.1} parent=31 // pred_region
        %s1045 = smul.u32 2, %s19
      $region36: #{conv_bn_relu.1} parent=31 // pred_fallthru
        _
    $region32: #{conv_bn_relu.1} parent=5 // pred_fallthru
      _
    %p1046 = scmp.le.s32.totalorder 2, %s9
    // Predicated region
    $region37: #{conv_bn_relu.1} parent=5 // pred_check
      %p1047 = pneg %p1046
    $region38: #{conv_bn_relu.1} parent=5 // pred_check_branch
      %1049 = sbr.rel (%p1047) target = $region40
    $region39: #{conv_bn_relu.1} parent=5 // pred_region
      %s1050 = ssub.s32 %s9, 2
      // Predicated region
      $region41: #{conv_bn_relu.1} parent=39 // pred_check
        %p1051 = pneg %p122
      $region42: #{conv_bn_relu.1} parent=39 // pred_check_branch
        %1053 = sbr.rel (%p1051) target = $region44
      $region43: #{conv_bn_relu.1} parent=39 // pred_region
        %s1054 = smul.u32 2, %s21
        %p1055 = scmp.lt.s32.totalorder %s20, 1
        %s1056 = scalar_select %p1055, %s20, 1
        %p1057 = scmp.lt.s32.totalorder %s1054, 1
        %s1058 = scalar_select %p1057, %s1054, 1
        %s1059 = smul.addr %s1056, 62
        %s1060 = sadd.s32 %s1058, %s1059
        %s1061 = smul.addr %s1060, 8
        %s1062 = scalar_lea.vmem %s3, %s1061
      $region44: #{conv_bn_relu.1} parent=39 // pred_fallthru
        _
    $region40: #{conv_bn_relu.1} parent=5 // pred_fallthru
      _
  $region6: #{conv_bn_relu.1} parent=0 // loop_footer
    %s13 = sadd.s32 1, %s9
  $region7: #{conv_bn_relu.1} parent=0 // loop_footer_branch
    %8 = sbr.rel target = $region3
  $region8: #{conv_bn_relu.1} parent=0 // loop_exit
    _

</llo_original>
